<compile_context>
chip_gen: v7x
topology: tpu7x:2x2x1
jax: 0.10.0
libtpu: 0.0.40
codegen_flags: <defaults>
</compile_context>

<pallas_src>
import jax
import jax.numpy as jnp
from jax import lax
from jax.experimental import pallas as pl
from jax.experimental.pallas import tpu as pltpu


def mlp_kernel(x_ref, tc_ref, b1_ref, w1x_ref, w2t_ref, b2_ref, y_ref):
    # x_ref   : VMEM [B, d_x]        bf16
    # tc_ref  : VMEM [B, H]          bf16  (precomputed w1_t[t] + w1_c[c])
    # b1_ref  : VMEM [1, H]          f32
    # w1x_ref : VMEM [d_x, H]        bf16
    # w2t_ref : VMEM [2*d_x, H]      bf16  (pre-transposed, lane-dense)
    # b2_ref  : VMEM [1, 2*d_x]      f32
    # y_ref   : VMEM [B, 2*d_x]      f32   (mean | softplus(log_var))

    # First matmul on the MXU in bf16, f32 accumulation.
    h = jnp.dot(x_ref[...], w1x_ref[...], preferred_element_type=jnp.float32)

    # One-hot(t/c) contribution arrives precomputed; add bias, ReLU (f32 VPU).
    h = h + tc_ref[...].astype(jnp.float32) + b1_ref[...]
    h = jnp.maximum(h, 0.0)

    # Second matmul: contract over H (dim 1 of both operands).  The RHS is
    # stored lane-dense as [2*d_x, H]; the required transpose goes to the
    # otherwise-idle XLU instead of paying a 64->128 lane pad on the DMA.
    y = lax.dot_general(
        h.astype(jnp.bfloat16), w2t_ref[...],
        dimension_numbers=(((1,), (1,)), ((), ())),
        preferred_element_type=jnp.float32)
    y = y + b2_ref[...]

    # softplus only on the log-var half (lane mask); one lane-dense f32 store.
    d = y.shape[-1] // 2
    col = lax.broadcasted_iota(jnp.int32, y.shape, 1)
    softplus = jnp.maximum(y, 0.0) + jnp.log1p(jnp.exp(-jnp.abs(y)))
    y_ref[...] = jnp.where(col >= d, softplus, y)


def _padded_bytes(a):
    """Approximate TPU tiled-layout footprint (sublane/lane padding)."""
    shape = a.shape
    itemsize = a.dtype.itemsize
    if len(shape) < 2:
        return int(-(-max(int(a.size), 1) * itemsize // 512) * 512)
    sub = 32 // itemsize          # f32 -> 8 sublanes, bf16 -> 16
    rows = -(-shape[-2] // sub) * sub
    cols = -(-shape[-1] // 128) * 128
    lead = 1
    for s in shape[:-2]:
        lead *= s
    return lead * rows * cols * itemsize


def linear_model_forward(x, t, c, params, timestep_dim, context_dim):
    """x: [B, ...] float32, t: [B] int32, c: [B] int32."""
    input_shape = x.shape
    B = x.shape[0]
    x_flat = x.reshape(B, -1).astype(jnp.bfloat16)
    d_x = x_flat.shape[-1]

    w1x, w1t, w1c, b1, w2t, b2 = params
    H = w1x.shape[-1]

    # one_hot(t) @ W1_t + one_hot(c) @ W1_c  ==  row gather; keep it in XLA so
    # the f32 tables never enter (or get DMA'd by) the kernel.  Clamp indices:
    # OOB dynamic indices inside a kernel would silently read adjacent VMEM.
    t_idx = jnp.clip(t.astype(jnp.int32), 0, timestep_dim - 1)
    c_idx = jnp.clip(c.astype(jnp.int32), 0, context_dim - 1)
    tc = (jnp.take(w1t, t_idx, axis=0)
          + jnp.take(w1c, c_idx, axis=0)).astype(jnp.bfloat16)      # [B, H]

    vmem = pl.BlockSpec(memory_space=pltpu.MemorySpace.VMEM)
    operands = (x_flat, tc, b1, w1x, w2t, b2)

    out_padded = -(-B // 8) * 8 * (-(-2 * d_x // 128) * 128) * 4
    cost = pl.CostEstimate(
        flops=2 * B * H * (d_x + 2 * d_x),
        transcendentals=2 * B * 2 * d_x,
        bytes_accessed=sum(_padded_bytes(a) for a in operands) + out_padded,
    )

    y = pl.pallas_call(
        mlp_kernel,
        out_shape=jax.ShapeDtypeStruct((B, 2 * d_x), jnp.float32),
        # Whole arrays fit trivially in VMEM at these sizes -> full-array
        # blocks, no grid.  (Batch grid + constant-block weight specs is the
        # scaling path once B grows; see TODO at top.)
        in_specs=[vmem] * len(operands),
        out_specs=vmem,
        compiler_params=pltpu.CompilerParams(
            vmem_limit_bytes=4 * 1024 * 1024),
        cost_estimate=cost,
    )(*operands)

    noise_mean = y[:, :d_x].reshape(input_shape)
    noise_var = y[:, d_x:].reshape(input_shape)
    return noise_mean, noise_var


def init_params(key, input_dim, timestep_dim, context_dim, hidden=2048):
    """Deterministic f32 master init mimicking nn.Linear (+/- 1/sqrt(fan_in))."""
    d_in = input_dim + timestep_dim + context_dim
    d_out = input_dim * 2
    k1, k2, k3, k4 = jax.random.split(key, 4)
    lim1 = 1.0 / jnp.sqrt(d_in)
    lim2 = 1.0 / jnp.sqrt(hidden)
    w1 = jax.random.uniform(k1, (d_in, hidden), jnp.float32, -lim1, lim1)
    b1 = jax.random.uniform(k2, (1, hidden), jnp.float32, -lim1, lim1)
    w2 = jax.random.uniform(k3, (hidden, d_out), jnp.float32, -lim2, lim2)
    b2 = jax.random.uniform(k4, (1, d_out), jnp.float32, -lim2, lim2)
    return (w1, b1, w2, b2)


def pack_params(master, input_dim, timestep_dim, context_dim):
    """Split + layout/dtype-convert f32 master weights into the kernel format."""
    w1, b1, w2, b2 = master
    w1x = w1[:input_dim].astype(jnp.bfloat16)                      # [d_x, H]
    w1t = w1[input_dim:input_dim + timestep_dim]                   # [T, H] f32 (wrapper gather)
    w1c = w1[input_dim + timestep_dim:]                            # [C, H] f32 (wrapper gather)
    w2t = jnp.transpose(w2).astype(jnp.bfloat16)                   # [2*d_x, H] lane-dense
    return (w1x, w1t, w1c, b1, w2t, b2)


if __name__ == "__main__":
    # Small shapes: x is [B, 4, 8] => input_dim = 32
    B = 2
    x_inner = (4, 8)
    input_dim = 4 * 8
    timestep_dim = 16
    context_dim = 8

    key = jax.random.PRNGKey(0)
    kx, kt, kc, kp = jax.random.split(key, 4)
    x = jax.random.normal(kx, (B,) + x_inner, dtype=jnp.float32)
    t = jax.random.randint(kt, (B,), 0, timestep_dim, dtype=jnp.int32)
    c = jax.random.randint(kc, (B,), 0, context_dim, dtype=jnp.int32)

    master = init_params(kp, input_dim, timestep_dim, context_dim)
    params = pack_params(master, input_dim, timestep_dim, context_dim)

    noise_mean, noise_var = linear_model_forward(
        x, t, c, params, timestep_dim, context_dim)
    jax.block_until_ready((noise_mean, noise_var))

    assert noise_mean.shape == x.shape
    assert noise_var.shape == x.shape
    assert bool(jnp.all(noise_var >= 0.0))

    # Pure-JAX f32 reference check (tolerance covers bf16 weights/activations;
    # accumulation is f32).
    w1, b1, w2, b2 = master
    x_cat = jnp.concatenate(
        [x.reshape(B, -1),
         jax.nn.one_hot(t, timestep_dim, dtype=jnp.float32),
         jax.nn.one_hot(c, context_dim, dtype=jnp.float32)], axis=-1)
    h_ref = jnp.maximum(x_cat @ w1 + b1, 0.0)
    y_ref = h_ref @ w2 + b2
    mean_ref, lv_ref = jnp.split(y_ref, 2, axis=-1)
    var_ref = jax.nn.softplus(lv_ref)
    assert jnp.allclose(noise_mean.reshape(B, -1), mean_ref,
                        atol=2e-2, rtol=2e-2)
    assert jnp.allclose(noise_var.reshape(B, -1), var_ref,
                        atol=2e-2, rtol=2e-2)

    print("KERNEL_OK")
</pallas_src>

<mosaic_0001>
module attributes {stable_mosaic.version = 11 : i64} {
  func.func @mlp_kernel(%arg0: memref<2x32xbf16, #tpu.memory_space<vmem>>, %arg1: memref<2x2048xbf16, #tpu.memory_space<vmem>>, %arg2: memref<1x2048xf32, #tpu.memory_space<vmem>>, %arg3: memref<32x2048xbf16, #tpu.memory_space<vmem>>, %arg4: memref<64x2048xbf16, #tpu.memory_space<vmem>>, %arg5: memref<1x64xf32, #tpu.memory_space<vmem>>, %arg6: memref<2x64xf32, #tpu.memory_space<vmem>>) attributes {dimension_semantics = [], scalar_prefetch = 0 : i64, scratch_operands = 0 : i64, tpu.core_type = #tpu.core_type<tc>} {
    %c0 = arith.constant 0 : index
    %c0_0 = arith.constant 0 : index
    %0 = vector.load %arg0[%c0, %c0_0] : memref<2x32xbf16, #tpu.memory_space<vmem>>, vector<2x32xbf16>
    %c0_1 = arith.constant 0 : index
    %c0_2 = arith.constant 0 : index
    %1 = vector.load %arg3[%c0_1, %c0_2] : memref<32x2048xbf16, #tpu.memory_space<vmem>>, vector<32x2048xbf16>
    %cst = arith.constant dense<0.000000e+00> : vector<2x2048xf32>
    %2 = tpu.matmul %0, %1, %cst {dimension_numbers = #tpu.dot_dimension_numbers<[1], [0], [0], [1], [0, 0, 1, 1], [], []>} : vector<2x32xbf16>, vector<32x2048xbf16>, vector<2x2048xf32> -> vector<2x2048xf32>
    %c0_3 = arith.constant 0 : index
    %c0_4 = arith.constant 0 : index
    %3 = vector.load %arg1[%c0_3, %c0_4] : memref<2x2048xbf16, #tpu.memory_space<vmem>>, vector<2x2048xbf16>
    %4 = arith.extf %3 : vector<2x2048xbf16> to vector<2x2048xf32>
    %5 = arith.addf %2, %4 : vector<2x2048xf32>
    %c0_5 = arith.constant 0 : index
    %c0_6 = arith.constant 0 : index
    %6 = vector.load %arg2[%c0_5, %c0_6] : memref<1x2048xf32, #tpu.memory_space<vmem>>, vector<1x2048xf32>
    %7 = vector.broadcast %6 : vector<1x2048xf32> to vector<2x2048xf32>
    %8 = arith.addf %5, %7 : vector<2x2048xf32>
    %cst_7 = arith.constant 0.000000e+00 : f32
    %9 = vector.broadcast %cst_7 : f32 to vector<2x2048xf32>
    %10 = arith.maximumf %8, %9 : vector<2x2048xf32>
    %11 = arith.truncf %10 : vector<2x2048xf32> to vector<2x2048xbf16>
    %c0_8 = arith.constant 0 : index
    %c0_9 = arith.constant 0 : index
    %12 = vector.load %arg4[%c0_8, %c0_9] : memref<64x2048xbf16, #tpu.memory_space<vmem>>, vector<64x2048xbf16>
    %cst_10 = arith.constant dense<0.000000e+00> : vector<2x64xf32>
    %13 = tpu.matmul %11, %12, %cst_10 {dimension_numbers = #tpu.dot_dimension_numbers<[1], [1], [0], [0], [0, 0, 1, 0], [], []>} : vector<2x2048xbf16>, vector<64x2048xbf16>, vector<2x64xf32> -> vector<2x64xf32>
    %c0_11 = arith.constant 0 : index
    %c0_12 = arith.constant 0 : index
    %14 = vector.load %arg5[%c0_11, %c0_12] : memref<1x64xf32, #tpu.memory_space<vmem>>, vector<1x64xf32>
    %15 = vector.broadcast %14 : vector<1x64xf32> to vector<2x64xf32>
    %16 = arith.addf %13, %15 : vector<2x64xf32>
    %17 = tpu.iota {dimensions = array<i32: 1>} : vector<2x64xi32>
    %cst_13 = arith.constant 0.000000e+00 : f32
    %18 = vector.broadcast %cst_13 : f32 to vector<2x64xf32>
    %19 = arith.maximumf %16, %18 : vector<2x64xf32>
    %20 = math.absf %16 : vector<2x64xf32>
    %cst_14 = arith.constant 0.000000e+00 : f32
    %21 = vector.broadcast %cst_14 : f32 to vector<2x64xf32>
    %22 = arith.subf %21, %20 : vector<2x64xf32>
    %23 = math.exp %22 : vector<2x64xf32>
    %24 = math.log1p %23 : vector<2x64xf32>
    %25 = arith.addf %19, %24 : vector<2x64xf32>
    %c32_i32 = arith.constant 32 : i32
    %26 = vector.broadcast %c32_i32 : i32 to vector<2x64xi32>
    %27 = arith.cmpi sge, %17, %26 : vector<2x64xi32>
    %28 = arith.select %27, %25, %16 : vector<2x64xi1>, vector<2x64xf32>
    %c0_15 = arith.constant 0 : index
    %c0_16 = arith.constant 0 : index
    %29 = vector.load %arg6[%c0_15, %c0_16] : memref<2x64xf32, #tpu.memory_space<vmem>>, vector<2x64xf32>
    tpu.vector_store %arg6[%c0_15, %c0_16], %28 {strides = array<i32>} : memref<2x64xf32, #tpu.memory_space<vmem>>, vector<2x64xf32>,
    return
  }
}

</mosaic_0001>

<llo_original>
// kernel: tpu_custom_call.1
$region0: #{tpu_custom_call.1}
  #allocation0 [shape = 'u32[]', space=smem, size = 0x4, offset = 0x4, fixed_abs, tag = 'smem constant byte address 0x4 - core index']
  #allocation1 [shape = 'u32[144,128]{1,0:T(1,128)}', space=vmem, size = 0x12000, scoped, tag = 'internal scratch']
  %s0 = inlined_call_operand.hbm [shape: bf16[2,32], index: 0, kind: input, shape index: {}]
  %s1 = inlined_call_operand.hbm [shape: bf16[2,2048], index: 1, kind: input, shape index: {}]
  %s2 = inlined_call_operand.hbm [shape: f32[1,2048], index: 2, kind: input, shape index: {}]
  %s3 = inlined_call_operand.hbm [shape: bf16[32,2048], index: 3, kind: input, shape index: {}]
  %s4 = inlined_call_operand.hbm [shape: bf16[64,2048], index: 4, kind: input, shape index: {}]
  %s5 = inlined_call_operand.vmem [shape: f32[1,64], index: 5, kind: input, shape index: {}]
  %s6 = inlined_call_operand.hbm [shape: f32[2,64], index: 6, kind: output, shape index: {}]
  %s7 = sld [smem:[#allocation0]]
  $region54: #{tpu_custom_call.1} parent=0
    _
  %s9 = ssub.s32 1, %s7
  %s10 = scalar_select 0, %s9, %s7
  $region1: #{tpu_custom_call.1} parent=0
    #allocation2 [shape = 'u8[512]{0}', space=vmem, size = 0x400, scoped, tag = 'input window, operand 0, single buffered']
    #allocation3 [shape = 's32[1]{0}', space=sflag, size = 0x4, scoped, tag = 'scoped memory for tpu_custom_call.1']
    #allocation4 [shape = 's32[1]{0}', space=sflag, size = 0x4, scoped, tag = 'scoped memory for tpu_custom_call.1']
    #allocation5 [shape = 'u8[8192]{0}', space=vmem, size = 0x2000, scoped, tag = 'input window, operand 1, single buffered']
    #allocation6 [shape = 's32[1]{0}', space=sflag, size = 0x4, scoped, tag = 'scoped memory for tpu_custom_call.1']
    #allocation7 [shape = 'u8[8192]{0}', space=vmem, size = 0x2000, scoped, tag = 'input window, operand 2, single buffered']
    #allocation8 [shape = 'u8[131072]{0}', space=vmem, size = 0x20000, scoped, tag = 'input window, operand 3, single buffered']
    #allocation9 [shape = 's32[1]{0}', space=sflag, size = 0x4, scoped, tag = 'scoped memory for tpu_custom_call.1']
    #allocation10 [shape = 'u8[262144]{0}', space=vmem, size = 0x40000, scoped, tag = 'input window, operand 4, single buffered']
    #allocation11 [shape = 'u8[1024]{0}', space=vmem, size = 0x400, scoped, tag = 'output window, operand 0, single buffered']
    %11 = vsyncpa [#allocation3], 0
    %12 = vsyncpa [#allocation6], 0
    %13 = vsyncpa [#allocation9], 0
    %14 = vsyncpa [#allocation4], 0
    // Predicated region
    $region2: #{tpu_custom_call.1} parent=1 // pred_check
      _
    $region3: #{tpu_custom_call.1} parent=1 // pred_check_branch
      %16 = sbr.rel (0) target = $region5
    $region4: #{tpu_custom_call.1} parent=1 // pred_region
      %s18 = ssub.s32 16, 16
      %19 = vsyncadd [#allocation3], %s18
      %s21 = sshll.u32 [#allocation2], 4
      %s22 = int_to_ptr.vmem [resolvable:$true] %s21
      %24 = dma.hbm_to_vmem [thread:$0]  %s0, 16, %s22, [#allocation3]
    $region5: #{tpu_custom_call.1} parent=1 // pred_fallthru
      _
    // Predicated region
    $region6: #{tpu_custom_call.1} parent=1 // pred_check
      _
    $region7: #{tpu_custom_call.1} parent=1 // pred_check_branch
      %26 = sbr.rel (0) target = $region9
    $region8: #{tpu_custom_call.1} parent=1 // pred_region
      %s28 = ssub.s32 256, 256
      %29 = vsyncadd [#allocation6], %s28
      %s31 = sshll.u32 [#allocation5], 4
      %s32 = int_to_ptr.vmem [resolvable:$true] %s31
      %34 = dma.hbm_to_vmem [thread:$0]  %s1, 256, %s32, [#allocation6]
    $region9: #{tpu_custom_call.1} parent=1 // pred_fallthru
      _
    // Predicated region
    $region10: #{tpu_custom_call.1} parent=1 // pred_check
      _
    $region11: #{tpu_custom_call.1} parent=1 // pred_check_branch
      %36 = sbr.rel (0) target = $region13
    $region12: #{tpu_custom_call.1} parent=1 // pred_region
      %s38 = ssub.s32 256, 256
      %39 = vsyncadd [#allocation6], %s38
      %s41 = sshll.u32 [#allocation7], 4
      %s42 = int_to_ptr.vmem [resolvable:$true] %s41
      %44 = dma.hbm_to_vmem [thread:$0]  %s2, 256, %s42, [#allocation6]
    $region13: #{tpu_custom_call.1} parent=1 // pred_fallthru
      _
    // Predicated region
    $region14: #{tpu_custom_call.1} parent=1 // pred_check
      _
    $region15: #{tpu_custom_call.1} parent=1 // pred_check_branch
      %46 = sbr.rel (0) target = $region17
    $region16: #{tpu_custom_call.1} parent=1 // pred_region
      %s48 = ssub.s32 4096, 4096
      %49 = vsyncadd [#allocation9], %s48
      %s50 = sshll.u32 [#allocation8], 4
      %s51 = int_to_ptr.vmem [resolvable:$true] %s50
      %56 = dma.hbm_to_vmem [thread:$0]  %s3, 4096, %s51, [#allocation9], 1024, 1024, 64
    $region17: #{tpu_custom_call.1} parent=1 // pred_fallthru
      _
    // Predicated region
    $region18: #{tpu_custom_call.1} parent=1 // pred_check
      _
    $region19: #{tpu_custom_call.1} parent=1 // pred_check_branch
      %58 = sbr.rel (0) target = $region21
    $region20: #{tpu_custom_call.1} parent=1 // pred_region
      %s60 = ssub.s32 8192, 8192
      %61 = vsyncadd [#allocation9], %s60
      %s62 = sshll.u32 [#allocation10], 4
      %s63 = int_to_ptr.vmem [resolvable:$true] %s62
      %68 = dma.hbm_to_vmem [thread:$0]  %s4, 8192, %s63, [#allocation9], 1024, 1024, 64
    $region21: #{tpu_custom_call.1} parent=1 // pred_fallthru
      _
    // Predicated region
    $region22: #{tpu_custom_call.1} parent=1 // pred_check
      _
    $region23: #{tpu_custom_call.1} parent=1 // pred_check_branch
      %70 = sbr.rel (0) target = $region25
    $region24: #{tpu_custom_call.1} parent=1 // pred_region
      _
    $region25: #{tpu_custom_call.1} parent=1 // pred_fallthru
      _
    // Predicated region
    $region26: #{tpu_custom_call.1} parent=1 // pred_check
      _
    $region27: #{tpu_custom_call.1} parent=1 // pred_check_branch
      %72 = sbr.rel (0) target = $region29
    $region28: #{tpu_custom_call.1} parent=1 // pred_region
      %73 = dma.done [#allocation3], 16
    $region29: #{tpu_custom_call.1} parent=1 // pred_fallthru
      _
    // Predicated region
    $region30: #{tpu_custom_call.1} parent=1 // pred_check
      _
    $region31: #{tpu_custom_call.1} parent=1 // pred_check_branch
      %75 = sbr.rel (0) target = $region33
    $region32: #{tpu_custom_call.1} parent=1 // pred_region
      %76 = dma.done [#allocation6], 256
    $region33: #{tpu_custom_call.1} parent=1 // pred_fallthru
      _
    // Predicated region
    $region34: #{tpu_custom_call.1} parent=1 // pred_check
      _
    $region35: #{tpu_custom_call.1} parent=1 // pred_check_branch
      %78 = sbr.rel (0) target = $region37
    $region36: #{tpu_custom_call.1} parent=1 // pred_region
      %79 = dma.done [#allocation6], 256
    $region37: #{tpu_custom_call.1} parent=1 // pred_fallthru
      _
    // Predicated region
    $region38: #{tpu_custom_call.1} parent=1 // pred_check
      _
    $region39: #{tpu_custom_call.1} parent=1 // pred_check_branch
      %81 = sbr.rel (0) target = $region41
    $region40: #{tpu_custom_call.1} parent=1 // pred_region
      %82 = dma.done [#allocation9], 4096
    $region41: #{tpu_custom_call.1} parent=1 // pred_fallthru
      _
    // Predicated region
    $region42: #{tpu_custom_call.1} parent=1 // pred_check
      _
    $region43: #{tpu_custom_call.1} parent=1 // pred_check_branch
      %84 = sbr.rel (0) target = $region45
    $region44: #{tpu_custom_call.1} parent=1 // pred_region
      %85 = dma.done [#allocation9], 8192
    $region45: #{tpu_custom_call.1} parent=1 // pred_fallthru
      _
    %v87 = vld [vmem:[#allocation2] sm:$0x1]
    %v88 = vld [vmem:[#allocation8] sm:$0xff]
    %v89 = vld [vmem:[#allocation8 + $0x8] sm:$0xff]
    %v90 = vld [vmem:[#allocation8 + $0x10] sm:$0xff]
    %v91 = vld [vmem:[#allocation8 + $0x18] sm:$0xff]
    %v92 = vld [vmem:[#allocation8 + $0x20] sm:$0xff]
    %v93 = vld [vmem:[#allocation8 + $0x28] sm:$0xff]
    %v94 = vld [vmem:[#allocation8 + $0x30] sm:$0xff]
    %v95 = vld [vmem:[#allocation8 + $0x38] sm:$0xff]
    %v96 = vld [vmem:[#allocation8 + $0x40] sm:$0xff]
    %v97 = vld [vmem:[#allocation8 + $0x48] sm:$0xff]
    %v98 = vld [vmem:[#allocation8 + $0x50] sm:$0xff]
    %v99 = vld [vmem:[#allocation8 + $0x58] sm:$0xff]
    %v100 = vld [vmem:[#allocation8 + $0x60] sm:$0xff]
    %v101 = vld [vmem:[#allocation8 + $0x68] sm:$0xff]
    %v102 = vld [vmem:[#allocation8 + $0x70] sm:$0xff]
    %v103 = vld [vmem:[#allocation8 + $0x78] sm:$0xff]
    %v104 = vld [vmem:[#allocation8 + $0x80] sm:$0xff]
    %v105 = vld [vmem:[#allocation8 + $0x88] sm:$0xff]
    %v106 = vld [vmem:[#allocation8 + $0x90] sm:$0xff]
    %v107 = vld [vmem:[#allocation8 + $0x98] sm:$0xff]
    %v108 = vld [vmem:[#allocation8 + $0xa0] sm:$0xff]
    %v109 = vld [vmem:[#allocation8 + $0xa8] sm:$0xff]
    %v110 = vld [vmem:[#allocation8 + $0xb0] sm:$0xff]
    %v111 = vld [vmem:[#allocation8 + $0xb8] sm:$0xff]
    %v112 = vld [vmem:[#allocation8 + $0xc0] sm:$0xff]
    %v113 = vld [vmem:[#allocation8 + $0xc8] sm:$0xff]
    %v114 = vld [vmem:[#allocation8 + $0xd0] sm:$0xff]
    %v115 = vld [vmem:[#allocation8 + $0xd8] sm:$0xff]
    %v116 = vld [vmem:[#allocation8 + $0xe0] sm:$0xff]
    %v117 = vld [vmem:[#allocation8 + $0xe8] sm:$0xff]
    %v118 = vld [vmem:[#allocation8 + $0xf0] sm:$0xff]
    %v119 = vld [vmem:[#allocation8 + $0xf8] sm:$0xff]
    %v120 = vld [vmem:[#allocation5] sm:$0xff]
    %v121 = vld [vmem:[#allocation5 + $0x8] sm:$0xff]
    %v122 = vunpack.c.l.bf16 %v120
    %v123 = vunpack.c.h.bf16 %v120
    %v124 = vunpack.c.l.bf16 %v121
    %v125 = vunpack.c.h.bf16 %v121
    %v158 = vunpack.c.l.b16 %v88
    %v159 = vunpack.c.h.b16 %v88
    %v160 = vunpack.c.l.b16 %v89
    %v161 = vunpack.c.h.b16 %v89
    %v162 = vunpack.c.l.b16 %v90
    %v163 = vunpack.c.h.b16 %v90
    %v164 = vunpack.c.l.b16 %v91
    %v165 = vunpack.c.h.b16 %v91
    %v166 = vunpack.c.l.b16 %v92
    %v167 = vunpack.c.h.b16 %v92
    %v168 = vunpack.c.l.b16 %v93
    %v169 = vunpack.c.h.b16 %v93
    %v170 = vunpack.c.l.b16 %v94
    %v171 = vunpack.c.h.b16 %v94
    %v172 = vunpack.c.l.b16 %v95
    %v173 = vunpack.c.h.b16 %v95
    %v174 = vunpack.c.l.b16 %v96
    %v175 = vunpack.c.h.b16 %v96
    %v176 = vunpack.c.l.b16 %v97
    %v177 = vunpack.c.h.b16 %v97
    %v178 = vunpack.c.l.b16 %v98
    %v179 = vunpack.c.h.b16 %v98
    %v180 = vunpack.c.l.b16 %v99
    %v181 = vunpack.c.h.b16 %v99
    %v182 = vunpack.c.l.b16 %v100
    %v183 = vunpack.c.h.b16 %v100
    %v184 = vunpack.c.l.b16 %v101
    %v185 = vunpack.c.h.b16 %v101
    %v186 = vunpack.c.l.b16 %v102
    %v187 = vunpack.c.h.b16 %v102
    %v188 = vunpack.c.l.b16 %v103
    %v189 = vunpack.c.h.b16 %v103
    %v190 = vunpack.c.l.b16 %v104
    %v191 = vunpack.c.h.b16 %v104
    %v192 = vunpack.c.l.b16 %v105
    %v193 = vunpack.c.h.b16 %v105
    %v194 = vunpack.c.l.b16 %v106
    %v195 = vunpack.c.h.b16 %v106
    %v196 = vunpack.c.l.b16 %v107
    %v197 = vunpack.c.h.b16 %v107
    %v198 = vunpack.c.l.b16 %v108
    %v199 = vunpack.c.h.b16 %v108
    %v200 = vunpack.c.l.b16 %v109
    %v201 = vunpack.c.h.b16 %v109
    %v202 = vunpack.c.l.b16 %v110
    %v203 = vunpack.c.h.b16 %v110
    %v204 = vunpack.c.l.b16 %v111
    %v205 = vunpack.c.h.b16 %v111
    %v206 = vunpack.c.l.b16 %v112
    %v207 = vunpack.c.h.b16 %v112
    %v208 = vunpack.c.l.b16 %v113
    %v209 = vunpack.c.h.b16 %v113
    %v210 = vunpack.c.l.b16 %v114
    %v211 = vunpack.c.h.b16 %v114
    %v212 = vunpack.c.l.b16 %v115
    %v213 = vunpack.c.h.b16 %v115
    %v214 = vunpack.c.l.b16 %v116
    %v215 = vunpack.c.h.b16 %v116
    %v216 = vunpack.c.l.b16 %v117
    %v217 = vunpack.c.h.b16 %v117
    %v218 = vunpack.c.l.b16 %v118
    %v219 = vunpack.c.h.b16 %v118
    %v220 = vunpack.c.l.b16 %v119
    %v221 = vunpack.c.h.b16 %v119
    %v222 = vpack.c.b16 %v174, %v158
    %v223 = vpack.c.b16 %v175, %v159
    %v224 = vpack.c.b16 %v176, %v160
    %v225 = vpack.c.b16 %v177, %v161
    %v226 = vpack.c.b16 %v178, %v162
    %v227 = vpack.c.b16 %v179, %v163
    %v228 = vpack.c.b16 %v180, %v164
    %v229 = vpack.c.b16 %v181, %v165
    %v230 = vpack.c.b16 %v182, %v166
    %v231 = vpack.c.b16 %v183, %v167
    %v232 = vpack.c.b16 %v184, %v168
    %v233 = vpack.c.b16 %v185, %v169
    %v234 = vpack.c.b16 %v186, %v170
    %v235 = vpack.c.b16 %v187, %v171
    %v236 = vpack.c.b16 %v188, %v172
    %v237 = vpack.c.b16 %v189, %v173
    %v238 = vpack.c.b16 %v206, %v190
    %v239 = vpack.c.b16 %v207, %v191
    %v240 = vpack.c.b16 %v208, %v192
    %v241 = vpack.c.b16 %v209, %v193
    %v242 = vpack.c.b16 %v210, %v194
    %v243 = vpack.c.b16 %v211, %v195
    %v244 = vpack.c.b16 %v212, %v196
    %v245 = vpack.c.b16 %v213, %v197
    %v246 = vpack.c.b16 %v214, %v198
    %v247 = vpack.c.b16 %v215, %v199
    %v248 = vpack.c.b16 %v216, %v200
    %v249 = vpack.c.b16 %v217, %v201
    %v250 = vpack.c.b16 %v218, %v202
    %v251 = vpack.c.b16 %v219, %v203
    %v252 = vpack.c.b16 %v220, %v204
    %v253 = vpack.c.b16 %v221, %v205
    %v290 = vcombine.high %v122, %v122
    %v292 = vunpack.c.l.s4 1983009808
    %v293 = vunpack.c.0.s8 %v292
    %v294 = vlaneseq
    %v295 = vshrl.u32 %v294, 7
    %v296 = vsub.s32 %v293, %v295
    %v297 = vrot.slane %v122, %v296
    %v299 = vunpack.c.l.s4 1983009808
    %v300 = vunpack.c.0.s8 %v299
    %v301 = vlaneseq
    %v302 = vshrl.u32 %v301, 7
    %v303 = vsub.s32 %v300, %v302
    %v304 = vrot.slane %v290, %v303
    %v305 = vcombine.high %v297, %v297
    %v306 = vcombine.high %v304, %v304
    %v307 = vcombine.high %v123, %v123
    %v309 = vunpack.c.l.s4 1983009808
    %v310 = vunpack.c.0.s8 %v309
    %v311 = vlaneseq
    %v312 = vshrl.u32 %v311, 7
    %v313 = vsub.s32 %v310, %v312
    %v314 = vrot.slane %v123, %v313
    %v316 = vunpack.c.l.s4 1983009808
    %v317 = vunpack.c.0.s8 %v316
    %v318 = vlaneseq
    %v319 = vshrl.u32 %v318, 7
    %v320 = vsub.s32 %v317, %v319
    %v321 = vrot.slane %v307, %v320
    %v322 = vcombine.high %v314, %v314
    %v323 = vcombine.high %v321, %v321
    %v324 = vcombine.high %v124, %v124
    %v326 = vunpack.c.l.s4 1983009808
    %v327 = vunpack.c.0.s8 %v326
    %v328 = vlaneseq
    %v329 = vshrl.u32 %v328, 7
    %v330 = vsub.s32 %v327, %v329
    %v331 = vrot.slane %v124, %v330
    %v333 = vunpack.c.l.s4 1983009808
    %v334 = vunpack.c.0.s8 %v333
    %v335 = vlaneseq
    %v336 = vshrl.u32 %v335, 7
    %v337 = vsub.s32 %v334, %v336
    %v338 = vrot.slane %v324, %v337
    %v339 = vcombine.high %v331, %v331
    %v340 = vcombine.high %v338, %v338
    %v341 = vcombine.high %v125, %v125
    %v343 = vunpack.c.l.s4 1983009808
    %v344 = vunpack.c.0.s8 %v343
    %v345 = vlaneseq
    %v346 = vshrl.u32 %v345, 7
    %v347 = vsub.s32 %v344, %v346
    %v348 = vrot.slane %v125, %v347
    %v350 = vunpack.c.l.s4 1983009808
    %v351 = vunpack.c.0.s8 %v350
    %v352 = vlaneseq
    %v353 = vshrl.u32 %v352, 7
    %v354 = vsub.s32 %v351, %v353
    %v355 = vrot.slane %v341, %v354
    %v356 = vcombine.high %v348, %v348
    %v357 = vcombine.high %v355, %v355
    %vm374 = vcmask 261120
    %v376 = vsel %vm374, %v87, 0
    %378 = vmatprep.subr.bf16.mxu0 %v223
    %379 = vmatpush1.bf16.msra.mxu0 %v222
    %380 = vmatprep.subr.bf16.mxu0 %v239
    %381 = vmatpush1.bf16.msra.mxu0 %v238
    %382 = vmatprep.subr.bf16.mxu0 0
    %383 = vmatpush1.bf16.msra.mxu0 0
    %384 = vmatprep.subr.bf16.mxu0 0
    %385 = vmatpush1.bf16.msra.mxu0 0
    %386 = vmatprep.subr.bf16.mxu0 0
    %387 = vmatpush1.bf16.msra.mxu0 0
    %388 = vmatprep.subr.bf16.mxu0 0
    %389 = vmatpush1.bf16.msra.mxu0 0
    %390 = vmatprep.subr.bf16.mxu0 0
    %391 = vmatpush1.bf16.msra.mxu0 0
    %392 = vmatprep.subr.bf16.mxu0 0
    %393 = vmatpush1.bf16.msra.mxu0 0
    %394 = vmatprep.subr.bf16.mxu0 0
    %395 = vmatpush1.bf16.msra.mxu0 0
    %396 = vmatprep.subr.bf16.mxu0 0
    %397 = vmatpush1.bf16.msra.mxu0 0
    %398 = vmatprep.subr.bf16.mxu0 0
    %399 = vmatpush1.bf16.msra.mxu0 0
    %400 = vmatprep.subr.bf16.mxu0 0
    %401 = vmatpush1.bf16.msra.mxu0 0
    %402 = vmatprep.subr.bf16.mxu0 0
    %403 = vmatpush1.bf16.msra.mxu0 0
    %404 = vmatprep.subr.bf16.mxu0 0
    %405 = vmatpush1.bf16.msra.mxu0 0
    %406 = vmatprep.subr.bf16.mxu0 0
    %407 = vmatpush1.bf16.msra.mxu0 0
    %408 = vmatprep.subr.bf16.mxu0 0
    %409 = vmatpush1.bf16.msra.mxu0 0
    %410 = vmatprep.mubr.bf16.mxu0 0
    %411 = vmatmul.mubr.bf16.gmra.mrb[0].mxu0 %v376
    %v412 = vpop.f32.mrb[0].mxu0
    %v413 = vadd.f32 %v297, %v412
    %v414 = vpop.f32.mrb[0].mxu0
    %v415 = vadd.f32 %v305, %v414
    %v416 = vpop.f32.mrb[0].mxu0
    %v417 = vpop.f32.mrb[0].mxu0
    %418 = vdwg.mxu0
    %419 = vmatprep.subr.bf16.mxu0 %v225
    %420 = vmatpush1.bf16.msra.mxu0 %v224
    %421 = vmatprep.subr.bf16.mxu0 %v241
    %422 = vmatpush1.bf16.msra.mxu0 %v240
    %423 = vmatprep.subr.bf16.mxu0 0
    %424 = vmatpush1.bf16.msra.mxu0 0
    %425 = vmatprep.subr.bf16.mxu0 0
    %426 = vmatpush1.bf16.msra.mxu0 0
    %427 = vmatprep.subr.bf16.mxu0 0
    %428 = vmatpush1.bf16.msra.mxu0 0
    %429 = vmatprep.subr.bf16.mxu0 0
    %430 = vmatpush1.bf16.msra.mxu0 0
    %431 = vmatprep.subr.bf16.mxu0 0
    %432 = vmatpush1.bf16.msra.mxu0 0
    %433 = vmatprep.subr.bf16.mxu0 0
    %434 = vmatpush1.bf16.msra.mxu0 0
    %435 = vmatprep.subr.bf16.mxu0 0
    %436 = vmatpush1.bf16.msra.mxu0 0
    %437 = vmatprep.subr.bf16.mxu0 0
    %438 = vmatpush1.bf16.msra.mxu0 0
    %439 = vmatprep.subr.bf16.mxu0 0
    %440 = vmatpush1.bf16.msra.mxu0 0
    %441 = vmatprep.subr.bf16.mxu0 0
    %442 = vmatpush1.bf16.msra.mxu0 0
    %443 = vmatprep.subr.bf16.mxu0 0
    %444 = vmatpush1.bf16.msra.mxu0 0
    %445 = vmatprep.subr.bf16.mxu0 0
    %446 = vmatpush1.bf16.msra.mxu0 0
    %447 = vmatprep.subr.bf16.mxu0 0
    %448 = vmatpush1.bf16.msra.mxu0 0
    %449 = vmatprep.subr.bf16.mxu0 0
    %450 = vmatpush1.bf16.msra.mxu0 0
    %451 = vmatprep.mubr.bf16.mxu0 0
    %452 = vmatmul.mubr.bf16.gmra.mrb[0].mxu0 %v376
    %v453 = vpop.f32.mrb[0].mxu0
    %v454 = vadd.f32 %v304, %v453
    %v455 = vpop.f32.mrb[0].mxu0
    %v456 = vadd.f32 %v306, %v455
    %v457 = vpop.f32.mrb[0].mxu0
    %v458 = vpop.f32.mrb[0].mxu0
    %459 = vdwg.mxu0
    %460 = vmatprep.subr.bf16.mxu0 %v227
    %461 = vmatpush1.bf16.msra.mxu0 %v226
    %462 = vmatprep.subr.bf16.mxu0 %v243
    %463 = vmatpush1.bf16.msra.mxu0 %v242
    %464 = vmatprep.subr.bf16.mxu0 0
    %465 = vmatpush1.bf16.msra.mxu0 0
    %466 = vmatprep.subr.bf16.mxu0 0
    %467 = vmatpush1.bf16.msra.mxu0 0
    %468 = vmatprep.subr.bf16.mxu0 0
    %469 = vmatpush1.bf16.msra.mxu0 0
    %470 = vmatprep.subr.bf16.mxu0 0
    %471 = vmatpush1.bf16.msra.mxu0 0
    %472 = vmatprep.subr.bf16.mxu0 0
    %473 = vmatpush1.bf16.msra.mxu0 0
    %474 = vmatprep.subr.bf16.mxu0 0
    %475 = vmatpush1.bf16.msra.mxu0 0
    %476 = vmatprep.subr.bf16.mxu0 0
    %477 = vmatpush1.bf16.msra.mxu0 0
    %478 = vmatprep.subr.bf16.mxu0 0
    %479 = vmatpush1.bf16.msra.mxu0 0
    %480 = vmatprep.subr.bf16.mxu0 0
    %481 = vmatpush1.bf16.msra.mxu0 0
    %482 = vmatprep.subr.bf16.mxu0 0
    %483 = vmatpush1.bf16.msra.mxu0 0
    %484 = vmatprep.subr.bf16.mxu0 0
    %485 = vmatpush1.bf16.msra.mxu0 0
    %486 = vmatprep.subr.bf16.mxu0 0
    %487 = vmatpush1.bf16.msra.mxu0 0
    %488 = vmatprep.subr.bf16.mxu0 0
    %489 = vmatpush1.bf16.msra.mxu0 0
    %490 = vmatprep.subr.bf16.mxu0 0
    %491 = vmatpush1.bf16.msra.mxu0 0
    %492 = vmatprep.mubr.bf16.mxu0 0
    %493 = vmatmul.mubr.bf16.gmra.mrb[0].mxu0 %v376
    %v494 = vpop.f32.mrb[0].mxu0
    %v495 = vadd.f32 %v314, %v494
    %v496 = vpop.f32.mrb[0].mxu0
    %v497 = vadd.f32 %v322, %v496
    %v498 = vpop.f32.mrb[0].mxu0
    %v499 = vpop.f32.mrb[0].mxu0
    %500 = vdwg.mxu0
    %501 = vmatprep.subr.bf16.mxu0 %v229
    %502 = vmatpush1.bf16.msra.mxu0 %v228
    %503 = vmatprep.subr.bf16.mxu0 %v245
    %504 = vmatpush1.bf16.msra.mxu0 %v244
    %505 = vmatprep.subr.bf16.mxu0 0
    %506 = vmatpush1.bf16.msra.mxu0 0
    %507 = vmatprep.subr.bf16.mxu0 0
    %508 = vmatpush1.bf16.msra.mxu0 0
    %509 = vmatprep.subr.bf16.mxu0 0
    %510 = vmatpush1.bf16.msra.mxu0 0
    %511 = vmatprep.subr.bf16.mxu0 0
    %512 = vmatpush1.bf16.msra.mxu0 0
    %513 = vmatprep.subr.bf16.mxu0 0
    %514 = vmatpush1.bf16.msra.mxu0 0
    %515 = vmatprep.subr.bf16.mxu0 0
    %516 = vmatpush1.bf16.msra.mxu0 0
    %517 = vmatprep.subr.bf16.mxu0 0
    %518 = vmatpush1.bf16.msra.mxu0 0
    %519 = vmatprep.subr.bf16.mxu0 0
    %520 = vmatpush1.bf16.msra.mxu0 0
    %521 = vmatprep.subr.bf16.mxu0 0
    %522 = vmatpush1.bf16.msra.mxu0 0
    %523 = vmatprep.subr.bf16.mxu0 0
    %524 = vmatpush1.bf16.msra.mxu0 0
    %525 = vmatprep.subr.bf16.mxu0 0
    %526 = vmatpush1.bf16.msra.mxu0 0
    %527 = vmatprep.subr.bf16.mxu0 0
    %528 = vmatpush1.bf16.msra.mxu0 0
    %529 = vmatprep.subr.bf16.mxu0 0
    %530 = vmatpush1.bf16.msra.mxu0 0
    %531 = vmatprep.subr.bf16.mxu0 0
    %532 = vmatpush1.bf16.msra.mxu0 0
    %533 = vmatprep.mubr.bf16.mxu0 0
    %534 = vmatmul.mubr.bf16.gmra.mrb[0].mxu0 %v376
    %v535 = vpop.f32.mrb[0].mxu0
    %v536 = vadd.f32 %v321, %v535
    %v537 = vpop.f32.mrb[0].mxu0
    %v538 = vadd.f32 %v323, %v537
    %v539 = vpop.f32.mrb[0].mxu0
    %v540 = vpop.f32.mrb[0].mxu0
    %541 = vdwg.mxu0
    %542 = vmatprep.subr.bf16.mxu0 %v231
    %543 = vmatpush1.bf16.msra.mxu0 %v230
    %544 = vmatprep.subr.bf16.mxu0 %v247
    %545 = vmatpush1.bf16.msra.mxu0 %v246
    %546 = vmatprep.subr.bf16.mxu0 0
    %547 = vmatpush1.bf16.msra.mxu0 0
    %548 = vmatprep.subr.bf16.mxu0 0
    %549 = vmatpush1.bf16.msra.mxu0 0
    %550 = vmatprep.subr.bf16.mxu0 0
    %551 = vmatpush1.bf16.msra.mxu0 0
    %552 = vmatprep.subr.bf16.mxu0 0
    %553 = vmatpush1.bf16.msra.mxu0 0
    %554 = vmatprep.subr.bf16.mxu0 0
    %555 = vmatpush1.bf16.msra.mxu0 0
    %556 = vmatprep.subr.bf16.mxu0 0
    %557 = vmatpush1.bf16.msra.mxu0 0
    %558 = vmatprep.subr.bf16.mxu0 0
    %559 = vmatpush1.bf16.msra.mxu0 0
    %560 = vmatprep.subr.bf16.mxu0 0
    %561 = vmatpush1.bf16.msra.mxu0 0
    %562 = vmatprep.subr.bf16.mxu0 0
    %563 = vmatpush1.bf16.msra.mxu0 0
    %564 = vmatprep.subr.bf16.mxu0 0
    %565 = vmatpush1.bf16.msra.mxu0 0
    %566 = vmatprep.subr.bf16.mxu0 0
    %567 = vmatpush1.bf16.msra.mxu0 0
    %568 = vmatprep.subr.bf16.mxu0 0
    %569 = vmatpush1.bf16.msra.mxu0 0
    %570 = vmatprep.subr.bf16.mxu0 0
    %571 = vmatpush1.bf16.msra.mxu0 0
    %572 = vmatprep.subr.bf16.mxu0 0
    %573 = vmatpush1.bf16.msra.mxu0 0
    %574 = vmatprep.mubr.bf16.mxu0 0
    %575 = vmatmul.mubr.bf16.gmra.mrb[0].mxu0 %v376
    %v576 = vpop.f32.mrb[0].mxu0
    %v577 = vadd.f32 %v331, %v576
    %v578 = vpop.f32.mrb[0].mxu0
    %v579 = vadd.f32 %v339, %v578
    %v580 = vpop.f32.mrb[0].mxu0
    %v581 = vpop.f32.mrb[0].mxu0
    %582 = vdwg.mxu0
    %583 = vmatprep.subr.bf16.mxu0 %v233
    %584 = vmatpush1.bf16.msra.mxu0 %v232
    %585 = vmatprep.subr.bf16.mxu0 %v249
    %586 = vmatpush1.bf16.msra.mxu0 %v248
    %587 = vmatprep.subr.bf16.mxu0 0
    %588 = vmatpush1.bf16.msra.mxu0 0
    %589 = vmatprep.subr.bf16.mxu0 0
    %590 = vmatpush1.bf16.msra.mxu0 0
    %591 = vmatprep.subr.bf16.mxu0 0
    %592 = vmatpush1.bf16.msra.mxu0 0
    %593 = vmatprep.subr.bf16.mxu0 0
    %594 = vmatpush1.bf16.msra.mxu0 0
    %595 = vmatprep.subr.bf16.mxu0 0
    %596 = vmatpush1.bf16.msra.mxu0 0
    %597 = vmatprep.subr.bf16.mxu0 0
    %598 = vmatpush1.bf16.msra.mxu0 0
    %599 = vmatprep.subr.bf16.mxu0 0
    %600 = vmatpush1.bf16.msra.mxu0 0
    %601 = vmatprep.subr.bf16.mxu0 0
    %602 = vmatpush1.bf16.msra.mxu0 0
    %603 = vmatprep.subr.bf16.mxu0 0
    %604 = vmatpush1.bf16.msra.mxu0 0
    %605 = vmatprep.subr.bf16.mxu0 0
    %606 = vmatpush1.bf16.msra.mxu0 0
    %607 = vmatprep.subr.bf16.mxu0 0
    %608 = vmatpush1.bf16.msra.mxu0 0
    %609 = vmatprep.subr.bf16.mxu0 0
    %610 = vmatpush1.bf16.msra.mxu0 0
    %611 = vmatprep.subr.bf16.mxu0 0
    %612 = vmatpush1.bf16.msra.mxu0 0
    %613 = vmatprep.subr.bf16.mxu0 0
    %614 = vmatpush1.bf16.msra.mxu0 0
    %615 = vmatprep.mubr.bf16.mxu0 0
    %616 = vmatmul.mubr.bf16.gmra.mrb[0].mxu0 %v376
    %v617 = vpop.f32.mrb[0].mxu0
    %v618 = vadd.f32 %v338, %v617
    %v619 = vpop.f32.mrb[0].mxu0
    %v620 = vadd.f32 %v340, %v619
    %v621 = vpop.f32.mrb[0].mxu0
    %v622 = vpop.f32.mrb[0].mxu0
    %623 = vdwg.mxu0
    %624 = vmatprep.subr.bf16.mxu0 %v235
    %625 = vmatpush1.bf16.msra.mxu0 %v234
    %626 = vmatprep.subr.bf16.mxu0 %v251
    %627 = vmatpush1.bf16.msra.mxu0 %v250
    %628 = vmatprep.subr.bf16.mxu0 0
    %629 = vmatpush1.bf16.msra.mxu0 0
    %630 = vmatprep.subr.bf16.mxu0 0
    %631 = vmatpush1.bf16.msra.mxu0 0
    %632 = vmatprep.subr.bf16.mxu0 0
    %633 = vmatpush1.bf16.msra.mxu0 0
    %634 = vmatprep.subr.bf16.mxu0 0
    %635 = vmatpush1.bf16.msra.mxu0 0
    %636 = vmatprep.subr.bf16.mxu0 0
    %637 = vmatpush1.bf16.msra.mxu0 0
    %638 = vmatprep.subr.bf16.mxu0 0
    %639 = vmatpush1.bf16.msra.mxu0 0
    %640 = vmatprep.subr.bf16.mxu0 0
    %641 = vmatpush1.bf16.msra.mxu0 0
    %642 = vmatprep.subr.bf16.mxu0 0
    %643 = vmatpush1.bf16.msra.mxu0 0
    %644 = vmatprep.subr.bf16.mxu0 0
    %645 = vmatpush1.bf16.msra.mxu0 0
    %646 = vmatprep.subr.bf16.mxu0 0
    %647 = vmatpush1.bf16.msra.mxu0 0
    %648 = vmatprep.subr.bf16.mxu0 0
    %649 = vmatpush1.bf16.msra.mxu0 0
    %650 = vmatprep.subr.bf16.mxu0 0
    %651 = vmatpush1.bf16.msra.mxu0 0
    %652 = vmatprep.subr.bf16.mxu0 0
    %653 = vmatpush1.bf16.msra.mxu0 0
    %654 = vmatprep.subr.bf16.mxu0 0
    %655 = vmatpush1.bf16.msra.mxu0 0
    %656 = vmatprep.mubr.bf16.mxu0 0
    %657 = vmatmul.mubr.bf16.gmra.mrb[0].mxu0 %v376
    %v658 = vpop.f32.mrb[0].mxu0
    %v659 = vadd.f32 %v348, %v658
    %v660 = vpop.f32.mrb[0].mxu0
    %v661 = vadd.f32 %v356, %v660
    %v662 = vpop.f32.mrb[0].mxu0
    %v663 = vpop.f32.mrb[0].mxu0
    %664 = vdwg.mxu0
    %665 = vmatprep.subr.bf16.mxu0 %v237
    %666 = vmatpush1.bf16.msra.mxu0 %v236
    %667 = vmatprep.subr.bf16.mxu0 %v253
    %668 = vmatpush1.bf16.msra.mxu0 %v252
    %669 = vmatprep.subr.bf16.mxu0 0
    %670 = vmatpush1.bf16.msra.mxu0 0
    %671 = vmatprep.subr.bf16.mxu0 0
    %672 = vmatpush1.bf16.msra.mxu0 0
    %673 = vmatprep.subr.bf16.mxu0 0
    %674 = vmatpush1.bf16.msra.mxu0 0
    %675 = vmatprep.subr.bf16.mxu0 0
    %676 = vmatpush1.bf16.msra.mxu0 0
    %677 = vmatprep.subr.bf16.mxu0 0
    %678 = vmatpush1.bf16.msra.mxu0 0
    %679 = vmatprep.subr.bf16.mxu0 0
    %680 = vmatpush1.bf16.msra.mxu0 0
    %681 = vmatprep.subr.bf16.mxu0 0
    %682 = vmatpush1.bf16.msra.mxu0 0
    %683 = vmatprep.subr.bf16.mxu0 0
    %684 = vmatpush1.bf16.msra.mxu0 0
    %685 = vmatprep.subr.bf16.mxu0 0
    %686 = vmatpush1.bf16.msra.mxu0 0
    %687 = vmatprep.subr.bf16.mxu0 0
    %688 = vmatpush1.bf16.msra.mxu0 0
    %689 = vmatprep.subr.bf16.mxu0 0
    %690 = vmatpush1.bf16.msra.mxu0 0
    %691 = vmatprep.subr.bf16.mxu0 0
    %692 = vmatpush1.bf16.msra.mxu0 0
    %693 = vmatprep.subr.bf16.mxu0 0
    %694 = vmatpush1.bf16.msra.mxu0 0
    %695 = vmatprep.subr.bf16.mxu0 0
    %696 = vmatpush1.bf16.msra.mxu0 0
    %697 = vmatprep.mubr.bf16.mxu0 0
    %698 = vmatmul.mubr.bf16.gmra.mrb[0].mxu0 %v376
    %v699 = vpop.f32.mrb[0].mxu0
    %v700 = vadd.f32 %v355, %v699
    %v701 = vpop.f32.mrb[0].mxu0
    %v702 = vadd.f32 %v357, %v701
    %v703 = vpop.f32.mrb[0].mxu0
    %v704 = vpop.f32.mrb[0].mxu0
    %705 = vdwg.mxu0
    %v706 = vld [vmem:[#allocation7] sm:$0xff]
    %v707 = vld [vmem:[#allocation7 + $0x8] sm:$0xff]
    %v710 = vlaneseq
    %v711 = vshrl.u32 %v710, 7
    %v712 = vsub.s32 0, %v711
    %v713 = vrot.slane %v706, %v712
    %v714 = vlaneseq
    %v715 = vshrl.u32 %v714, 7
    %v716 = vsub.s32 1, %v715
    %v717 = vrot.slane %v706, %v716
    %v718 = vlaneseq
    %v719 = vshrl.u32 %v718, 7
    %v720 = vsub.s32 2, %v719
    %v721 = vrot.slane %v706, %v720
    %v722 = vlaneseq
    %v723 = vshrl.u32 %v722, 7
    %v724 = vsub.s32 3, %v723
    %v725 = vrot.slane %v706, %v724
    %v726 = vlaneseq
    %v727 = vshrl.u32 %v726, 7
    %v728 = vsub.s32 4, %v727
    %v729 = vrot.slane %v706, %v728
    %v730 = vlaneseq
    %v731 = vshrl.u32 %v730, 7
    %v732 = vsub.s32 5, %v731
    %v733 = vrot.slane %v706, %v732
    %v734 = vlaneseq
    %v735 = vshrl.u32 %v734, 7
    %v736 = vsub.s32 6, %v735
    %v737 = vrot.slane %v706, %v736
    %v738 = vlaneseq
    %v739 = vshrl.u32 %v738, 7
    %v740 = vsub.s32 7, %v739
    %v741 = vrot.slane %v706, %v740
    %v742 = vlaneseq
    %v743 = vshrl.u32 %v742, 7
    %v744 = vsub.s32 0, %v743
    %v745 = vrot.slane %v707, %v744
    %v746 = vlaneseq
    %v747 = vshrl.u32 %v746, 7
    %v748 = vsub.s32 1, %v747
    %v749 = vrot.slane %v707, %v748
    %v750 = vlaneseq
    %v751 = vshrl.u32 %v750, 7
    %v752 = vsub.s32 2, %v751
    %v753 = vrot.slane %v707, %v752
    %v754 = vlaneseq
    %v755 = vshrl.u32 %v754, 7
    %v756 = vsub.s32 3, %v755
    %v757 = vrot.slane %v707, %v756
    %v758 = vlaneseq
    %v759 = vshrl.u32 %v758, 7
    %v760 = vsub.s32 4, %v759
    %v761 = vrot.slane %v707, %v760
    %v762 = vlaneseq
    %v763 = vshrl.u32 %v762, 7
    %v764 = vsub.s32 5, %v763
    %v765 = vrot.slane %v707, %v764
    %v766 = vlaneseq
    %v767 = vshrl.u32 %v766, 7
    %v768 = vsub.s32 6, %v767
    %v769 = vrot.slane %v707, %v768
    %v770 = vlaneseq
    %v771 = vshrl.u32 %v770, 7
    %v772 = vsub.s32 7, %v771
    %v773 = vrot.slane %v707, %v772
    %v790 = vadd.f32 %v413, %v713
    %v791 = vadd.f32 %v415, %v717
    %v792 = vadd.f32 %v454, %v721
    %v793 = vadd.f32 %v456, %v725
    %v794 = vadd.f32 %v495, %v729
    %v795 = vadd.f32 %v497, %v733
    %v796 = vadd.f32 %v536, %v737
    %v797 = vadd.f32 %v538, %v741
    %v798 = vadd.f32 %v577, %v745
    %v799 = vadd.f32 %v579, %v749
    %v800 = vadd.f32 %v618, %v753
    %v801 = vadd.f32 %v620, %v757
    %v802 = vadd.f32 %v659, %v761
    %v803 = vadd.f32 %v661, %v765
    %v804 = vadd.f32 %v700, %v769
    %v805 = vadd.f32 %v702, %v773
    %v806 = vmax.f32 %v790, 0.0
    %v807 = vmax.f32 %v791, 0.0
    %v808 = vmax.f32 %v792, 0.0
    %v809 = vmax.f32 %v793, 0.0
    %v810 = vmax.f32 %v794, 0.0
    %v811 = vmax.f32 %v795, 0.0
    %v812 = vmax.f32 %v796, 0.0
    %v813 = vmax.f32 %v797, 0.0
    %v814 = vmax.f32 %v798, 0.0
    %v815 = vmax.f32 %v799, 0.0
    %v816 = vmax.f32 %v800, 0.0
    %v817 = vmax.f32 %v801, 0.0
    %v818 = vmax.f32 %v802, 0.0
    %v819 = vmax.f32 %v803, 0.0
    %v820 = vmax.f32 %v804, 0.0
    %v821 = vmax.f32 %v805, 0.0
    %v822 = vpack.c.bf16 %v806, %v806
    %v823 = vpack.c.bf16 %v807, %v807
    %v824 = vpack.c.bf16 %v808, %v808
    %v825 = vpack.c.bf16 %v809, %v809
    %v826 = vpack.c.bf16 %v810, %v810
    %v827 = vpack.c.bf16 %v811, %v811
    %v828 = vpack.c.bf16 %v812, %v812
    %v829 = vpack.c.bf16 %v813, %v813
    %v830 = vpack.c.bf16 %v814, %v814
    %v831 = vpack.c.bf16 %v815, %v815
    %v832 = vpack.c.bf16 %v816, %v816
    %v833 = vpack.c.bf16 %v817, %v817
    %v834 = vpack.c.bf16 %v818, %v818
    %v835 = vpack.c.bf16 %v819, %v819
    %v836 = vpack.c.bf16 %v820, %v820
    %v837 = vpack.c.bf16 %v821, %v821
    %v838 = vld [vmem:[#allocation10] sm:$0xff]
    %v839 = vld [vmem:[#allocation10 + $0x8] sm:$0xff]
    %v840 = vld [vmem:[#allocation10 + $0x10] sm:$0xff]
    %v841 = vld [vmem:[#allocation10 + $0x18] sm:$0xff]
    %v842 = vld [vmem:[#allocation10 + $0x20] sm:$0xff]
    %v843 = vld [vmem:[#allocation10 + $0x28] sm:$0xff]
    %v844 = vld [vmem:[#allocation10 + $0x30] sm:$0xff]
    %v845 = vld [vmem:[#allocation10 + $0x38] sm:$0xff]
    %v846 = vld [vmem:[#allocation10 + $0x40] sm:$0xff]
    %v847 = vld [vmem:[#allocation10 + $0x48] sm:$0xff]
    %v848 = vld [vmem:[#allocation10 + $0x50] sm:$0xff]
    %v849 = vld [vmem:[#allocation10 + $0x58] sm:$0xff]
    %v850 = vld [vmem:[#allocation10 + $0x60] sm:$0xff]
    %v851 = vld [vmem:[#allocation10 + $0x68] sm:$0xff]
    %v852 = vld [vmem:[#allocation10 + $0x70] sm:$0xff]
    %v853 = vld [vmem:[#allocation10 + $0x78] sm:$0xff]
    %v854 = vld [vmem:[#allocation10 + $0x80] sm:$0xff]
    %v855 = vld [vmem:[#allocation10 + $0x88] sm:$0xff]
    %v856 = vld [vmem:[#allocation10 + $0x90] sm:$0xff]
    %v857 = vld [vmem:[#allocation10 + $0x98] sm:$0xff]
    %v858 = vld [vmem:[#allocation10 + $0xa0] sm:$0xff]
    %v859 = vld [vmem:[#allocation10 + $0xa8] sm:$0xff]
    %v860 = vld [vmem:[#allocation10 + $0xb0] sm:$0xff]
    %v861 = vld [vmem:[#allocation10 + $0xb8] sm:$0xff]
    %v862 = vld [vmem:[#allocation10 + $0xc0] sm:$0xff]
    %v863 = vld [vmem:[#allocation10 + $0xc8] sm:$0xff]
    %v864 = vld [vmem:[#allocation10 + $0xd0] sm:$0xff]
    %v865 = vld [vmem:[#allocation10 + $0xd8] sm:$0xff]
    %v866 = vld [vmem:[#allocation10 + $0xe0] sm:$0xff]
    %v867 = vld [vmem:[#allocation10 + $0xe8] sm:$0xff]
    %v868 = vld [vmem:[#allocation10 + $0xf0] sm:$0xff]
    %v869 = vld [vmem:[#allocation10 + $0xf8] sm:$0xff]
    %v870 = vld [vmem:[#allocation10 + $0x100] sm:$0xff]
    %v871 = vld [vmem:[#allocation10 + $0x108] sm:$0xff]
    %v872 = vld [vmem:[#allocation10 + $0x110] sm:$0xff]
    %v873 = vld [vmem:[#allocation10 + $0x118] sm:$0xff]
    %v874 = vld [vmem:[#allocation10 + $0x120] sm:$0xff]
    %v875 = vld [vmem:[#allocation10 + $0x128] sm:$0xff]
    %v876 = vld [vmem:[#allocation10 + $0x130] sm:$0xff]
    %v877 = vld [vmem:[#allocation10 + $0x138] sm:$0xff]
    %v878 = vld [vmem:[#allocation10 + $0x140] sm:$0xff]
    %v879 = vld [vmem:[#allocation10 + $0x148] sm:$0xff]
    %v880 = vld [vmem:[#allocation10 + $0x150] sm:$0xff]
    %v881 = vld [vmem:[#allocation10 + $0x158] sm:$0xff]
    %v882 = vld [vmem:[#allocation10 + $0x160] sm:$0xff]
    %v883 = vld [vmem:[#allocation10 + $0x168] sm:$0xff]
    %v884 = vld [vmem:[#allocation10 + $0x170] sm:$0xff]
    %v885 = vld [vmem:[#allocation10 + $0x178] sm:$0xff]
    %v886 = vld [vmem:[#allocation10 + $0x180] sm:$0xff]
    %v887 = vld [vmem:[#allocation10 + $0x188] sm:$0xff]
    %v888 = vld [vmem:[#allocation10 + $0x190] sm:$0xff]
    %v889 = vld [vmem:[#allocation10 + $0x198] sm:$0xff]
    %v890 = vld [vmem:[#allocation10 + $0x1a0] sm:$0xff]
    %v891 = vld [vmem:[#allocation10 + $0x1a8] sm:$0xff]
    %v892 = vld [vmem:[#allocation10 + $0x1b0] sm:$0xff]
    %v893 = vld [vmem:[#allocation10 + $0x1b8] sm:$0xff]
    %v894 = vld [vmem:[#allocation10 + $0x1c0] sm:$0xff]
    %v895 = vld [vmem:[#allocation10 + $0x1c8] sm:$0xff]
    %v896 = vld [vmem:[#allocation10 + $0x1d0] sm:$0xff]
    %v897 = vld [vmem:[#allocation10 + $0x1d8] sm:$0xff]
    %v898 = vld [vmem:[#allocation10 + $0x1e0] sm:$0xff]
    %v899 = vld [vmem:[#allocation10 + $0x1e8] sm:$0xff]
    %v900 = vld [vmem:[#allocation10 + $0x1f0] sm:$0xff]
    %v901 = vld [vmem:[#allocation10 + $0x1f8] sm:$0xff]
    %v902 = vld [vmem:[%s5] sm:$0x1]
    %v904 = vlaneseq
    %v905 = vshrl.u32 %v904, 7
    %v906 = vsub.s32 0, %v905
    %v907 = vrot.slane %v902, %v906
    %v973 = vunpack.c.l.b16 %v838
    %v974 = vunpack.c.h.b16 %v838
    %v975 = vunpack.c.l.b16 %v839
    %v976 = vunpack.c.h.b16 %v839
    %v977 = vunpack.c.l.b16 %v840
    %v978 = vunpack.c.h.b16 %v840
    %v979 = vunpack.c.l.b16 %v841
    %v980 = vunpack.c.h.b16 %v841
    %v981 = vunpack.c.l.b16 %v842
    %v982 = vunpack.c.h.b16 %v842
    %v983 = vunpack.c.l.b16 %v843
    %v984 = vunpack.c.h.b16 %v843
    %v985 = vunpack.c.l.b16 %v844
    %v986 = vunpack.c.h.b16 %v844
    %v987 = vunpack.c.l.b16 %v845
    %v988 = vunpack.c.h.b16 %v845
    %v989 = vunpack.c.l.b16 %v846
    %v990 = vunpack.c.h.b16 %v846
    %v991 = vunpack.c.l.b16 %v847
    %v992 = vunpack.c.h.b16 %v847
    %v993 = vunpack.c.l.b16 %v848
    %v994 = vunpack.c.h.b16 %v848
    %v995 = vunpack.c.l.b16 %v849
    %v996 = vunpack.c.h.b16 %v849
    %v997 = vunpack.c.l.b16 %v850
    %v998 = vunpack.c.h.b16 %v850
    %v999 = vunpack.c.l.b16 %v851
    %v1000 = vunpack.c.h.b16 %v851
    %v1001 = vunpack.c.l.b16 %v852
    %v1002 = vunpack.c.h.b16 %v852
    %v1003 = vunpack.c.l.b16 %v853
    %v1004 = vunpack.c.h.b16 %v853
    %v1005 = vunpack.c.l.b16 %v854
    %v1006 = vunpack.c.h.b16 %v854
    %v1007 = vunpack.c.l.b16 %v855
    %v1008 = vunpack.c.h.b16 %v855
    %v1009 = vunpack.c.l.b16 %v856
    %v1010 = vunpack.c.h.b16 %v856
    %v1011 = vunpack.c.l.b16 %v857
    %v1012 = vunpack.c.h.b16 %v857
    %v1013 = vunpack.c.l.b16 %v858
    %v1014 = vunpack.c.h.b16 %v858
    %v1015 = vunpack.c.l.b16 %v859
    %v1016 = vunpack.c.h.b16 %v859
    %v1017 = vunpack.c.l.b16 %v860
    %v1018 = vunpack.c.h.b16 %v860
    %v1019 = vunpack.c.l.b16 %v861
    %v1020 = vunpack.c.h.b16 %v861
    %v1021 = vunpack.c.l.b16 %v862
    %v1022 = vunpack.c.h.b16 %v862
    %v1023 = vunpack.c.l.b16 %v863
    %v1024 = vunpack.c.h.b16 %v863
    %v1025 = vunpack.c.l.b16 %v864
    %v1026 = vunpack.c.h.b16 %v864
    %v1027 = vunpack.c.l.b16 %v865
    %v1028 = vunpack.c.h.b16 %v865
    %v1029 = vunpack.c.l.b16 %v866
    %v1030 = vunpack.c.h.b16 %v866
    %v1031 = vunpack.c.l.b16 %v867
    %v1032 = vunpack.c.h.b16 %v867
    %v1033 = vunpack.c.l.b16 %v868
    %v1034 = vunpack.c.h.b16 %v868
    %v1035 = vunpack.c.l.b16 %v869
    %v1036 = vunpack.c.h.b16 %v869
    %v1037 = vunpack.c.l.b16 %v870
    %v1038 = vunpack.c.h.b16 %v870
    %v1039 = vunpack.c.l.b16 %v871
    %v1040 = vunpack.c.h.b16 %v871
    %v1041 = vunpack.c.l.b16 %v872
    %v1042 = vunpack.c.h.b16 %v872
    %v1043 = vunpack.c.l.b16 %v873
    %v1044 = vunpack.c.h.b16 %v873
    %v1045 = vunpack.c.l.b16 %v874
    %v1046 = vunpack.c.h.b16 %v874
    %v1047 = vunpack.c.l.b16 %v875
    %v1048 = vunpack.c.h.b16 %v875
    %v1049 = vunpack.c.l.b16 %v876
    %v1050 = vunpack.c.h.b16 %v876
    %v1051 = vunpack.c.l.b16 %v877
    %v1052 = vunpack.c.h.b16 %v877
    %v1053 = vunpack.c.l.b16 %v878
    %v1054 = vunpack.c.h.b16 %v878
    %v1055 = vunpack.c.l.b16 %v879
    %v1056 = vunpack.c.h.b16 %v879
    %v1057 = vunpack.c.l.b16 %v880
    %v1058 = vunpack.c.h.b16 %v880
    %v1059 = vunpack.c.l.b16 %v881
    %v1060 = vunpack.c.h.b16 %v881
    %v1061 = vunpack.c.l.b16 %v882
    %v1062 = vunpack.c.h.b16 %v882
    %v1063 = vunpack.c.l.b16 %v883
    %v1064 = vunpack.c.h.b16 %v883
    %v1065 = vunpack.c.l.b16 %v884
    %v1066 = vunpack.c.h.b16 %v884
    %v1067 = vunpack.c.l.b16 %v885
    %v1068 = vunpack.c.h.b16 %v885
    %v1069 = vunpack.c.l.b16 %v886
    %v1070 = vunpack.c.h.b16 %v886
    %v1071 = vunpack.c.l.b16 %v887
    %v1072 = vunpack.c.h.b16 %v887
    %v1073 = vunpack.c.l.b16 %v888
    %v1074 = vunpack.c.h.b16 %v888
    %v1075 = vunpack.c.l.b16 %v889
    %v1076 = vunpack.c.h.b16 %v889
    %v1077 = vunpack.c.l.b16 %v890
    %v1078 = vunpack.c.h.b16 %v890
    %v1079 = vunpack.c.l.b16 %v891
    %v1080 = vunpack.c.h.b16 %v891
    %v1081 = vunpack.c.l.b16 %v892
    %v1082 = vunpack.c.h.b16 %v892
    %v1083 = vunpack.c.l.b16 %v893
    %v1084 = vunpack.c.h.b16 %v893
    %v1085 = vunpack.c.l.b16 %v894
    %v1086 = vunpack.c.h.b16 %v894
    %v1087 = vunpack.c.l.b16 %v895
    %v1088 = vunpack.c.h.b16 %v895
    %v1089 = vunpack.c.l.b16 %v896
    %v1090 = vunpack.c.h.b16 %v896
    %v1091 = vunpack.c.l.b16 %v897
    %v1092 = vunpack.c.h.b16 %v897
    %v1093 = vunpack.c.l.b16 %v898
    %v1094 = vunpack.c.h.b16 %v898
    %v1095 = vunpack.c.l.b16 %v899
    %v1096 = vunpack.c.h.b16 %v899
    %v1097 = vunpack.c.l.b16 %v900
    %v1098 = vunpack.c.h.b16 %v900
    %v1099 = vunpack.c.l.b16 %v901
    %v1100 = vunpack.c.h.b16 %v901
    %v1101 = vpack.c.b16 %v989, %v973
    %v1102 = vpack.c.b16 %v990, %v974
    %v1103 = vpack.c.b16 %v991, %v975
    %v1104 = vpack.c.b16 %v992, %v976
    %v1105 = vpack.c.b16 %v993, %v977
    %v1106 = vpack.c.b16 %v994, %v978
    %v1107 = vpack.c.b16 %v995, %v979
    %v1108 = vpack.c.b16 %v996, %v980
    %v1109 = vpack.c.b16 %v997, %v981
    %v1110 = vpack.c.b16 %v998, %v982
    %v1111 = vpack.c.b16 %v999, %v983
    %v1112 = vpack.c.b16 %v1000, %v984
    %v1113 = vpack.c.b16 %v1001, %v985
    %v1114 = vpack.c.b16 %v1002, %v986
    %v1115 = vpack.c.b16 %v1003, %v987
    %v1116 = vpack.c.b16 %v1004, %v988
    %v1117 = vpack.c.b16 %v1021, %v1005
    %v1118 = vpack.c.b16 %v1022, %v1006
    %v1119 = vpack.c.b16 %v1023, %v1007
    %v1120 = vpack.c.b16 %v1024, %v1008
    %v1121 = vpack.c.b16 %v1025, %v1009
    %v1122 = vpack.c.b16 %v1026, %v1010
    %v1123 = vpack.c.b16 %v1027, %v1011
    %v1124 = vpack.c.b16 %v1028, %v1012
    %v1125 = vpack.c.b16 %v1029, %v1013
    %v1126 = vpack.c.b16 %v1030, %v1014
    %v1127 = vpack.c.b16 %v1031, %v1015
    %v1128 = vpack.c.b16 %v1032, %v1016
    %v1129 = vpack.c.b16 %v1033, %v1017
    %v1130 = vpack.c.b16 %v1034, %v1018
    %v1131 = vpack.c.b16 %v1035, %v1019
    %v1132 = vpack.c.b16 %v1036, %v1020
    %v1133 = vpack.c.b16 %v1053, %v1037
    %v1134 = vpack.c.b16 %v1054, %v1038
    %v1135 = vpack.c.b16 %v1055, %v1039
    %v1136 = vpack.c.b16 %v1056, %v1040
    %v1137 = vpack.c.b16 %v1057, %v1041
    %v1138 = vpack.c.b16 %v1058, %v1042
    %v1139 = vpack.c.b16 %v1059, %v1043
    %v1140 = vpack.c.b16 %v1060, %v1044
    %v1141 = vpack.c.b16 %v1061, %v1045
    %v1142 = vpack.c.b16 %v1062, %v1046
    %v1143 = vpack.c.b16 %v1063, %v1047
    %v1144 = vpack.c.b16 %v1064, %v1048
    %v1145 = vpack.c.b16 %v1065, %v1049
    %v1146 = vpack.c.b16 %v1066, %v1050
    %v1147 = vpack.c.b16 %v1067, %v1051
    %v1148 = vpack.c.b16 %v1068, %v1052
    %v1149 = vpack.c.b16 %v1085, %v1069
    %v1150 = vpack.c.b16 %v1086, %v1070
    %v1151 = vpack.c.b16 %v1087, %v1071
    %v1152 = vpack.c.b16 %v1088, %v1072
    %v1153 = vpack.c.b16 %v1089, %v1073
    %v1154 = vpack.c.b16 %v1090, %v1074
    %v1155 = vpack.c.b16 %v1091, %v1075
    %v1156 = vpack.c.b16 %v1092, %v1076
    %v1157 = vpack.c.b16 %v1093, %v1077
    %v1158 = vpack.c.b16 %v1094, %v1078
    %v1159 = vpack.c.b16 %v1095, %v1079
    %v1160 = vpack.c.b16 %v1096, %v1080
    %v1161 = vpack.c.b16 %v1097, %v1081
    %v1162 = vpack.c.b16 %v1098, %v1082
    %v1163 = vpack.c.b16 %v1099, %v1083
    %v1164 = vpack.c.b16 %v1100, %v1084
    %1229 = vmatprep.subr.bf16.mxu0 %v1102
    %1230 = vmatpush1.bf16.xpose.msra.mxu0 %v1101
    %1231 = vmatprep.subr.bf16.mxu0 %v1118
    %1232 = vmatpush1.bf16.xpose.msra.mxu0 %v1117
    %1233 = vmatprep.subr.bf16.mxu0 %v1134
    %1234 = vmatpush1.bf16.xpose.msra.mxu0 %v1133
    %1235 = vmatprep.subr.bf16.mxu0 %v1150
    %1236 = vmatpush1.bf16.xpose.msra.mxu0 %v1149
    %1237 = vmatprep.subr.bf16.mxu0 0
    %1238 = vmatpush1.bf16.xpose.msra.mxu0 0
    %1239 = vmatprep.subr.bf16.mxu0 0
    %1240 = vmatpush1.bf16.xpose.msra.mxu0 0
    %1241 = vmatprep.subr.bf16.mxu0 0
    %1242 = vmatpush1.bf16.xpose.msra.mxu0 0
    %1243 = vmatprep.subr.bf16.mxu0 0
    %1244 = vmatpush1.bf16.xpose.msra.mxu0 0
    %1245 = vmatprep.subr.bf16.mxu0 0
    %1246 = vmatpush1.bf16.xpose.msra.mxu0 0
    %1247 = vmatprep.subr.bf16.mxu0 0
    %1248 = vmatpush1.bf16.xpose.msra.mxu0 0
    %1249 = vmatprep.subr.bf16.mxu0 0
    %1250 = vmatpush1.bf16.xpose.msra.mxu0 0
    %1251 = vmatprep.subr.bf16.mxu0 0
    %1252 = vmatpush1.bf16.xpose.msra.mxu0 0
    %1253 = vmatprep.subr.bf16.mxu0 0
    %1254 = vmatpush1.bf16.xpose.msra.mxu0 0
    %1255 = vmatprep.subr.bf16.mxu0 0
    %1256 = vmatpush1.bf16.xpose.msra.mxu0 0
    %1257 = vmatprep.subr.bf16.mxu0 0
    %1258 = vmatpush1.bf16.xpose.msra.mxu0 0
    %1259 = vmatprep.subr.bf16.mxu0 0
    %1260 = vmatpush1.bf16.xpose.msra.mxu0 0
    %1261 = vmatprep.mubr.bf16.mxu0 %v823
    %1262 = vmatmul.mubr.bf16.gmra.mrb[0].mxu0 %v822
    %v1263 = vpop.f32.mrb[0].mxu0
    %v1264 = vadd.f32 %v907, %v1263
    %v1265 = vpop.f32.mrb[0].mxu0
    %v1266 = vpop.f32.mrb[0].mxu0
    %v1267 = vpop.f32.mrb[0].mxu0
    %1268 = vdwg.mxu0
    %1269 = vmatprep.subr.bf16.mxu0 %v1104
    %1270 = vmatpush1.bf16.xpose.msra.mxu0 %v1103
    %1271 = vmatprep.subr.bf16.mxu0 %v1120
    %1272 = vmatpush1.bf16.xpose.msra.mxu0 %v1119
    %1273 = vmatprep.subr.bf16.mxu0 %v1136
    %1274 = vmatpush1.bf16.xpose.msra.mxu0 %v1135
    %1275 = vmatprep.subr.bf16.mxu0 %v1152
    %1276 = vmatpush1.bf16.xpose.msra.mxu0 %v1151
    %1277 = vmatprep.subr.bf16.mxu0 0
    %1278 = vmatpush1.bf16.xpose.msra.mxu0 0
    %1279 = vmatprep.subr.bf16.mxu0 0
    %1280 = vmatpush1.bf16.xpose.msra.mxu0 0
    %1281 = vmatprep.subr.bf16.mxu0 0
    %1282 = vmatpush1.bf16.xpose.msra.mxu0 0
    %1283 = vmatprep.subr.bf16.mxu0 0
    %1284 = vmatpush1.bf16.xpose.msra.mxu0 0
    %1285 = vmatprep.subr.bf16.mxu0 0
    %1286 = vmatpush1.bf16.xpose.msra.mxu0 0
    %1287 = vmatprep.subr.bf16.mxu0 0
    %1288 = vmatpush1.bf16.xpose.msra.mxu0 0
    %1289 = vmatprep.subr.bf16.mxu0 0
    %1290 = vmatpush1.bf16.xpose.msra.mxu0 0
    %1291 = vmatprep.subr.bf16.mxu0 0
    %1292 = vmatpush1.bf16.xpose.msra.mxu0 0
    %1293 = vmatprep.subr.bf16.mxu0 0
    %1294 = vmatpush1.bf16.xpose.msra.mxu0 0
    %1295 = vmatprep.subr.bf16.mxu0 0
    %1296 = vmatpush1.bf16.xpose.msra.mxu0 0
    %1297 = vmatprep.subr.bf16.mxu0 0
    %1298 = vmatpush1.bf16.xpose.msra.mxu0 0
    %1299 = vmatprep.subr.bf16.mxu0 0
    %1300 = vmatpush1.bf16.xpose.msra.mxu0 0
    %1301 = vmatprep.mubr.bf16.mxu0 %v825
    %1302 = vmatmul.mubr.bf16.gmra.mrb[0].mxu0 %v824
    %v1303 = vpop.f32.mrb[0].mxu0
    %v1304 = vadd.f32 %v1264, %v1303
    %v1305 = vpop.f32.mrb[0].mxu0
    %v1306 = vpop.f32.mrb[0].mxu0
    %v1307 = vpop.f32.mrb[0].mxu0
    %1308 = vdwg.mxu0
    %1309 = vmatprep.subr.bf16.mxu0 %v1106
    %1310 = vmatpush1.bf16.xpose.msra.mxu0 %v1105
    %1311 = vmatprep.subr.bf16.mxu0 %v1122
    %1312 = vmatpush1.bf16.xpose.msra.mxu0 %v1121
    %1313 = vmatprep.subr.bf16.mxu0 %v1138
    %1314 = vmatpush1.bf16.xpose.msra.mxu0 %v1137
    %1315 = vmatprep.subr.bf16.mxu0 %v1154
    %1316 = vmatpush1.bf16.xpose.msra.mxu0 %v1153
    %1317 = vmatprep.subr.bf16.mxu0 0
    %1318 = vmatpush1.bf16.xpose.msra.mxu0 0
    %1319 = vmatprep.subr.bf16.mxu0 0
    %1320 = vmatpush1.bf16.xpose.msra.mxu0 0
    %1321 = vmatprep.subr.bf16.mxu0 0
    %1322 = vmatpush1.bf16.xpose.msra.mxu0 0
    %1323 = vmatprep.subr.bf16.mxu0 0
    %1324 = vmatpush1.bf16.xpose.msra.mxu0 0
    %1325 = vmatprep.subr.bf16.mxu0 0
    %1326 = vmatpush1.bf16.xpose.msra.mxu0 0
    %1327 = vmatprep.subr.bf16.mxu0 0
    %1328 = vmatpush1.bf16.xpose.msra.mxu0 0
    %1329 = vmatprep.subr.bf16.mxu0 0
    %1330 = vmatpush1.bf16.xpose.msra.mxu0 0
    %1331 = vmatprep.subr.bf16.mxu0 0
    %1332 = vmatpush1.bf16.xpose.msra.mxu0 0
    %1333 = vmatprep.subr.bf16.mxu0 0
    %1334 = vmatpush1.bf16.xpose.msra.mxu0 0
    %1335 = vmatprep.subr.bf16.mxu0 0
    %1336 = vmatpush1.bf16.xpose.msra.mxu0 0
    %1337 = vmatprep.subr.bf16.mxu0 0
    %1338 = vmatpush1.bf16.xpose.msra.mxu0 0
    %1339 = vmatprep.subr.bf16.mxu0 0
    %1340 = vmatpush1.bf16.xpose.msra.mxu0 0
    %1341 = vmatprep.mubr.bf16.mxu0 %v827
    %1342 = vmatmul.mubr.bf16.gmra.mrb[0].mxu0 %v826
    %v1343 = vpop.f32.mrb[0].mxu0
    %v1344 = vadd.f32 %v1304, %v1343
    %v1345 = vpop.f32.mrb[0].mxu0
    %v1346 = vpop.f32.mrb[0].mxu0
    %v1347 = vpop.f32.mrb[0].mxu0
    %1348 = vdwg.mxu0
    %1349 = vmatprep.subr.bf16.mxu0 %v1108
    %1350 = vmatpush1.bf16.xpose.msra.mxu0 %v1107
    %1351 = vmatprep.subr.bf16.mxu0 %v1124
    %1352 = vmatpush1.bf16.xpose.msra.mxu0 %v1123
    %1353 = vmatprep.subr.bf16.mxu0 %v1140
    %1354 = vmatpush1.bf16.xpose.msra.mxu0 %v1139
    %1355 = vmatprep.subr.bf16.mxu0 %v1156
    %1356 = vmatpush1.bf16.xpose.msra.mxu0 %v1155
    %1357 = vmatprep.subr.bf16.mxu0 0
    %1358 = vmatpush1.bf16.xpose.msra.mxu0 0
    %1359 = vmatprep.subr.bf16.mxu0 0
    %1360 = vmatpush1.bf16.xpose.msra.mxu0 0
    %1361 = vmatprep.subr.bf16.mxu0 0
    %1362 = vmatpush1.bf16.xpose.msra.mxu0 0
    %1363 = vmatprep.subr.bf16.mxu0 0
    %1364 = vmatpush1.bf16.xpose.msra.mxu0 0
    %1365 = vmatprep.subr.bf16.mxu0 0
    %1366 = vmatpush1.bf16.xpose.msra.mxu0 0
    %1367 = vmatprep.subr.bf16.mxu0 0
    %1368 = vmatpush1.bf16.xpose.msra.mxu0 0
    %1369 = vmatprep.subr.bf16.mxu0 0
    %1370 = vmatpush1.bf16.xpose.msra.mxu0 0
    %1371 = vmatprep.subr.bf16.mxu0 0
    %1372 = vmatpush1.bf16.xpose.msra.mxu0 0
    %1373 = vmatprep.subr.bf16.mxu0 0
    %1374 = vmatpush1.bf16.xpose.msra.mxu0 0
    %1375 = vmatprep.subr.bf16.mxu0 0
    %1376 = vmatpush1.bf16.xpose.msra.mxu0 0
    %1377 = vmatprep.subr.bf16.mxu0 0
    %1378 = vmatpush1.bf16.xpose.msra.mxu0 0
    %1379 = vmatprep.subr.bf16.mxu0 0
    %1380 = vmatpush1.bf16.xpose.msra.mxu0 0
    %1381 = vmatprep.mubr.bf16.mxu0 %v829
    %1382 = vmatmul.mubr.bf16.gmra.mrb[0].mxu0 %v828
    %v1383 = vpop.f32.mrb[0].mxu0
    %v1384 = vadd.f32 %v1344, %v1383
    %v1385 = vpop.f32.mrb[0].mxu0
    %v1386 = vpop.f32.mrb[0].mxu0
    %v1387 = vpop.f32.mrb[0].mxu0
    %1388 = vdwg.mxu0
    %1389 = vmatprep.subr.bf16.mxu0 %v1110
    %1390 = vmatpush1.bf16.xpose.msra.mxu0 %v1109
    %1391 = vmatprep.subr.bf16.mxu0 %v1126
    %1392 = vmatpush1.bf16.xpose.msra.mxu0 %v1125
    %1393 = vmatprep.subr.bf16.mxu0 %v1142
    %1394 = vmatpush1.bf16.xpose.msra.mxu0 %v1141
    %1395 = vmatprep.subr.bf16.mxu0 %v1158
    %1396 = vmatpush1.bf16.xpose.msra.mxu0 %v1157
    %1397 = vmatprep.subr.bf16.mxu0 0
    %1398 = vmatpush1.bf16.xpose.msra.mxu0 0
    %1399 = vmatprep.subr.bf16.mxu0 0
    %1400 = vmatpush1.bf16.xpose.msra.mxu0 0
    %1401 = vmatprep.subr.bf16.mxu0 0
    %1402 = vmatpush1.bf16.xpose.msra.mxu0 0
    %1403 = vmatprep.subr.bf16.mxu0 0
    %1404 = vmatpush1.bf16.xpose.msra.mxu0 0
    %1405 = vmatprep.subr.bf16.mxu0 0
    %1406 = vmatpush1.bf16.xpose.msra.mxu0 0
    %1407 = vmatprep.subr.bf16.mxu0 0
    %1408 = vmatpush1.bf16.xpose.msra.mxu0 0
    %1409 = vmatprep.subr.bf16.mxu0 0
    %1410 = vmatpush1.bf16.xpose.msra.mxu0 0
    %1411 = vmatprep.subr.bf16.mxu0 0
    %1412 = vmatpush1.bf16.xpose.msra.mxu0 0
    %1413 = vmatprep.subr.bf16.mxu0 0
    %1414 = vmatpush1.bf16.xpose.msra.mxu0 0
    %1415 = vmatprep.subr.bf16.mxu0 0
    %1416 = vmatpush1.bf16.xpose.msra.mxu0 0
    %1417 = vmatprep.subr.bf16.mxu0 0
    %1418 = vmatpush1.bf16.xpose.msra.mxu0 0
    %1419 = vmatprep.subr.bf16.mxu0 0
    %1420 = vmatpush1.bf16.xpose.msra.mxu0 0
    %1421 = vmatprep.mubr.bf16.mxu0 %v831
    %1422 = vmatmul.mubr.bf16.gmra.mrb[0].mxu0 %v830
    %v1423 = vpop.f32.mrb[0].mxu0
    %v1424 = vadd.f32 %v1384, %v1423
    %v1425 = vpop.f32.mrb[0].mxu0
    %v1426 = vpop.f32.mrb[0].mxu0
    %v1427 = vpop.f32.mrb[0].mxu0
    %1428 = vdwg.mxu0
    %1429 = vmatprep.subr.bf16.mxu0 %v1112
    %1430 = vmatpush1.bf16.xpose.msra.mxu0 %v1111
    %1431 = vmatprep.subr.bf16.mxu0 %v1128
    %1432 = vmatpush1.bf16.xpose.msra.mxu0 %v1127
    %1433 = vmatprep.subr.bf16.mxu0 %v1144
    %1434 = vmatpush1.bf16.xpose.msra.mxu0 %v1143
    %1435 = vmatprep.subr.bf16.mxu0 %v1160
    %1436 = vmatpush1.bf16.xpose.msra.mxu0 %v1159
    %1437 = vmatprep.subr.bf16.mxu0 0
    %1438 = vmatpush1.bf16.xpose.msra.mxu0 0
    %1439 = vmatprep.subr.bf16.mxu0 0
    %1440 = vmatpush1.bf16.xpose.msra.mxu0 0
    %1441 = vmatprep.subr.bf16.mxu0 0
    %1442 = vmatpush1.bf16.xpose.msra.mxu0 0
    %1443 = vmatprep.subr.bf16.mxu0 0
    %1444 = vmatpush1.bf16.xpose.msra.mxu0 0
    %1445 = vmatprep.subr.bf16.mxu0 0
    %1446 = vmatpush1.bf16.xpose.msra.mxu0 0
    %1447 = vmatprep.subr.bf16.mxu0 0
    %1448 = vmatpush1.bf16.xpose.msra.mxu0 0
    %1449 = vmatprep.subr.bf16.mxu0 0
    %1450 = vmatpush1.bf16.xpose.msra.mxu0 0
    %1451 = vmatprep.subr.bf16.mxu0 0
    %1452 = vmatpush1.bf16.xpose.msra.mxu0 0
    %1453 = vmatprep.subr.bf16.mxu0 0
    %1454 = vmatpush1.bf16.xpose.msra.mxu0 0
    %1455 = vmatprep.subr.bf16.mxu0 0
    %1456 = vmatpush1.bf16.xpose.msra.mxu0 0
    %1457 = vmatprep.subr.bf16.mxu0 0
    %1458 = vmatpush1.bf16.xpose.msra.mxu0 0
    %1459 = vmatprep.subr.bf16.mxu0 0
    %1460 = vmatpush1.bf16.xpose.msra.mxu0 0
    %1461 = vmatprep.mubr.bf16.mxu0 %v833
    %1462 = vmatmul.mubr.bf16.gmra.mrb[0].mxu0 %v832
    %v1463 = vpop.f32.mrb[0].mxu0
    %v1464 = vadd.f32 %v1424, %v1463
    %v1465 = vpop.f32.mrb[0].mxu0
    %v1466 = vpop.f32.mrb[0].mxu0
    %v1467 = vpop.f32.mrb[0].mxu0
    %1468 = vdwg.mxu0
    %1469 = vmatprep.subr.bf16.mxu0 %v1114
    %1470 = vmatpush1.bf16.xpose.msra.mxu0 %v1113
    %1471 = vmatprep.subr.bf16.mxu0 %v1130
    %1472 = vmatpush1.bf16.xpose.msra.mxu0 %v1129
    %1473 = vmatprep.subr.bf16.mxu0 %v1146
    %1474 = vmatpush1.bf16.xpose.msra.mxu0 %v1145
    %1475 = vmatprep.subr.bf16.mxu0 %v1162
    %1476 = vmatpush1.bf16.xpose.msra.mxu0 %v1161
    %1477 = vmatprep.subr.bf16.mxu0 0
    %1478 = vmatpush1.bf16.xpose.msra.mxu0 0
    %1479 = vmatprep.subr.bf16.mxu0 0
    %1480 = vmatpush1.bf16.xpose.msra.mxu0 0
    %1481 = vmatprep.subr.bf16.mxu0 0
    %1482 = vmatpush1.bf16.xpose.msra.mxu0 0
    %1483 = vmatprep.subr.bf16.mxu0 0
    %1484 = vmatpush1.bf16.xpose.msra.mxu0 0
    %1485 = vmatprep.subr.bf16.mxu0 0
    %1486 = vmatpush1.bf16.xpose.msra.mxu0 0
    %1487 = vmatprep.subr.bf16.mxu0 0
    %1488 = vmatpush1.bf16.xpose.msra.mxu0 0
    %1489 = vmatprep.subr.bf16.mxu0 0
    %1490 = vmatpush1.bf16.xpose.msra.mxu0 0
    %1491 = vmatprep.subr.bf16.mxu0 0
    %1492 = vmatpush1.bf16.xpose.msra.mxu0 0
    %1493 = vmatprep.subr.bf16.mxu0 0
    %1494 = vmatpush1.bf16.xpose.msra.mxu0 0
    %1495 = vmatprep.subr.bf16.mxu0 0
    %1496 = vmatpush1.bf16.xpose.msra.mxu0 0
    %1497 = vmatprep.subr.bf16.mxu0 0
    %1498 = vmatpush1.bf16.xpose.msra.mxu0 0
    %1499 = vmatprep.subr.bf16.mxu0 0
    %1500 = vmatpush1.bf16.xpose.msra.mxu0 0
    %1501 = vmatprep.mubr.bf16.mxu0 %v835
    %1502 = vmatmul.mubr.bf16.gmra.mrb[0].mxu0 %v834
    %v1503 = vpop.f32.mrb[0].mxu0
    %v1504 = vadd.f32 %v1464, %v1503
    %v1505 = vpop.f32.mrb[0].mxu0
    %v1506 = vpop.f32.mrb[0].mxu0
    %v1507 = vpop.f32.mrb[0].mxu0
    %1508 = vdwg.mxu0
    %1509 = vmatprep.subr.bf16.mxu0 %v1116
    %1510 = vmatpush1.bf16.xpose.msra.mxu0 %v1115
    %1511 = vmatprep.subr.bf16.mxu0 %v1132
    %1512 = vmatpush1.bf16.xpose.msra.mxu0 %v1131
    %1513 = vmatprep.subr.bf16.mxu0 %v1148
    %1514 = vmatpush1.bf16.xpose.msra.mxu0 %v1147
    %1515 = vmatprep.subr.bf16.mxu0 %v1164
    %1516 = vmatpush1.bf16.xpose.msra.mxu0 %v1163
    %1517 = vmatprep.subr.bf16.mxu0 0
    %1518 = vmatpush1.bf16.xpose.msra.mxu0 0
    %1519 = vmatprep.subr.bf16.mxu0 0
    %1520 = vmatpush1.bf16.xpose.msra.mxu0 0
    %1521 = vmatprep.subr.bf16.mxu0 0
    %1522 = vmatpush1.bf16.xpose.msra.mxu0 0
    %1523 = vmatprep.subr.bf16.mxu0 0
    %1524 = vmatpush1.bf16.xpose.msra.mxu0 0
    %1525 = vmatprep.subr.bf16.mxu0 0
    %1526 = vmatpush1.bf16.xpose.msra.mxu0 0
    %1527 = vmatprep.subr.bf16.mxu0 0
    %1528 = vmatpush1.bf16.xpose.msra.mxu0 0
    %1529 = vmatprep.subr.bf16.mxu0 0
    %1530 = vmatpush1.bf16.xpose.msra.mxu0 0
    %1531 = vmatprep.subr.bf16.mxu0 0
    %1532 = vmatpush1.bf16.xpose.msra.mxu0 0
    %1533 = vmatprep.subr.bf16.mxu0 0
    %1534 = vmatpush1.bf16.xpose.msra.mxu0 0
    %1535 = vmatprep.subr.bf16.mxu0 0
    %1536 = vmatpush1.bf16.xpose.msra.mxu0 0
    %1537 = vmatprep.subr.bf16.mxu0 0
    %1538 = vmatpush1.bf16.xpose.msra.mxu0 0
    %1539 = vmatprep.subr.bf16.mxu0 0
    %1540 = vmatpush1.bf16.xpose.msra.mxu0 0
    %1541 = vmatprep.mubr.bf16.mxu0 %v837
    %1542 = vmatmul.mubr.bf16.gmra.mrb[0].mxu0 %v836
    %v1543 = vpop.f32.mrb[0].mxu0
    %v1544 = vadd.f32 %v1504, %v1543
    %v1545 = vpop.f32.mrb[0].mxu0
    %v1546 = vpop.f32.mrb[0].mxu0
    %v1547 = vpop.f32.mrb[0].mxu0
    %1548 = vdwg.mxu0
    %v1549 = vlaneseq
    %v1550 = vand.u32 %v1549, 127
    %v1551 = vmax.f32 %v1544, 0.0
    %v1552 = vand.u32 2147483647, %v1544
    %v1553 = vsub.f32 0.0, %v1552
    %v1554 = vmul.f32 %v1553, 1.442695
    %v1555 = vpow.pop %v1554
    %v1556 = vadd.f32 %v1555, 1.0
    %v1557 = vlog2.pop %v1556
    %v1558 = vmul.f32 %v1557, 0.6931472
    %v1559 = vmul.f32 -0.5, %v1555
    %v1560 = vadd.f32 %v1559, 1.0
    %v1561 = vmul.f32 %v1560, %v1555
    %v1562 = vand.u32 2147483647, %v1555
    %vm1563 = vcmp.lt.f32.partialorder %v1562, 0.0004427343
    %v1564 = vsel %vm1563, %v1561, %v1558
    %v1565 = vadd.f32 %v1551, %v1564
    %vm1566 = vcmp.ge.s32.totalorder %v1550, 32
    %v1567 = vsel %vm1566, %v1565, %v1544
    %vm1568 = vcmask 517120
    %1569 = vst.msk [vmem:[#allocation11] sm:$0x3] %vm1568, %v1567
    // Predicated region
    $region46: #{tpu_custom_call.1} parent=1 // pred_check
      _
    $region47: #{tpu_custom_call.1} parent=1 // pred_check_branch
      %1571 = sbr.rel (0) target = $region49
    $region48: #{tpu_custom_call.1} parent=1 // pred_region
      %s1573 = ssub.s32 32, 32
      %1574 = vsyncadd [#allocation4], %s1573
      %s1576 = sshll.u32 [#allocation11], 4
      %s1577 = int_to_ptr.vmem [resolvable:$true] %s1576
      %1579 = dma.vmem_to_hbm [thread:$0]  %s1577, 32, %s6, [#allocation4]
    $region49: #{tpu_custom_call.1} parent=1 // pred_fallthru
      _
    // Predicated region
    $region50: #{tpu_custom_call.1} parent=1 // pred_check
      _
    $region51: #{tpu_custom_call.1} parent=1 // pred_check_branch
      %1581 = sbr.rel (0) target = $region53
    $region52: #{tpu_custom_call.1} parent=1 // pred_region
      %1582 = dma.done [#allocation4], 32
    $region53: #{tpu_custom_call.1} parent=1 // pred_fallthru
      _
    %1583 = vsyncpa [#allocation3], 1
    %1584 = vsyncpa [#allocation6], 1
    %1585 = vsyncpa [#allocation9], 1
    %1586 = vsyncpa [#allocation4], 1

</llo_original>
